<compile_context>
chip_gen: v6e
topology: v6e:2x2x1
jax: 0.10.0
libtpu: 0.0.40
codegen_flags: <defaults>
</compile_context>

<pallas_src>
import math
import numpy as np

import jax
import jax.numpy as jnp
from jax import lax
from jax.experimental import pallas as pl
from jax.experimental.pallas import tpu as pltpu

# ----- model config (from the reference script) -----
BATCH = 2
DIM = 12
NUM_HEADS = 3
HEAD_DIM = DIM // NUM_HEADS
SEQ = 10                      # small demo sequence length
NEG_INF = -1000000000.0       # matches masked_fill(mask == 0, -1e9)

# ----- padded / packed layout constants -----
S_PAD = 16                    # seq padded to a sublane multiple (8)
N_ROWS = BATCH * S_PAD        # 32: every matmul row extent is 8-aligned
OUT_PAD = 128                 # lane-dense output width (sliced to DIM)
QKV_DIM = 3 * DIM             # fused QKV width (36)

# weight-slab row offsets (matrix blocks start on 8-aligned rows)
R_WQKV = 0                    # [DIM, 3*DIM]
R_WO = 16                     # [DIM, OUT_PAD] (zero-padded out_proj weight)
R_BQKV = 32                   # [1, 3*DIM]
R_BO = 33                     # [1, OUT_PAD]
R_HMASK = 34                  # NUM_HEADS rows: per-head 0/1 lane mask over DIM
SLAB_ROWS = 40                # padded to a multiple of 8


def mha_kernel(x_ref, slab_ref, amask_ref, out_ref):
    f32 = jnp.float32
    scale = 1.0 / math.sqrt(HEAD_DIM)

    x = x_ref[...]                                           # [N_ROWS, DIM]

    # ---- hoisted constants: loaded / broadcast once, reused per head ----
    mask_add = amask_ref[...]                                # [N, N] {0, -1e9}
    head_masks = [
        jnp.broadcast_to(slab_ref[R_HMASK + h:R_HMASK + h + 1, 0:DIM],
                         (N_ROWS, DIM))
        for h in range(NUM_HEADS)
    ]

    # ---- fused QKV projection: one 2-D MXU matmul ----
    wqkv = slab_ref[R_WQKV:R_WQKV + DIM, 0:QKV_DIM]          # [D, 3D]
    bqkv = slab_ref[R_BQKV:R_BQKV + 1, 0:QKV_DIM]            # [1, 3D]
    qkv = jnp.dot(x, wqkv, preferred_element_type=f32) + bqkv

    q = qkv[:, 0:DIM]
    k = qkv[:, DIM:2 * DIM]
    v = qkv[:, 2 * DIM:3 * DIM]

    # ---- attention: full-width contractions + masked recombination ----
    attn = jnp.zeros((N_ROWS, DIM), f32)
    for h in range(NUM_HEADS):
        hm = head_masks[h]
        # (q*hm) . k over the full DIM equals q_h @ k_h^T because the mask
        # zeroes every other head's lanes of q.  The additive mask blocks
        # cross-batch / padded / user-masked keys (exp underflows to 0).
        s = lax.dot_general(q * hm, k, (((1,), (1,)), ((), ())),
                            preferred_element_type=f32)      # [N, N]
        s = s * scale + mask_add
        s = s - jnp.max(s, axis=-1, keepdims=True)
        p = jnp.exp(s)
        p = p * pl.reciprocal(jnp.sum(p, axis=-1, keepdims=True), approx=True)
        o = jnp.dot(p, v, preferred_element_type=f32)        # [N, D]
        attn = attn + o * hm                                 # keep head-h lanes

    # ---- lane-dense output projection ----
    wo = slab_ref[R_WO:R_WO + DIM, :]                        # [D, 128] padded
    bo = slab_ref[R_BO:R_BO + 1, :]                          # [1, 128] padded
    out_ref[...] = jnp.dot(attn, wo, preferred_element_type=f32) + bo


def build_params(key):
    """nn.Linear-style deterministic init: U(-1/sqrt(fan_in), 1/sqrt(fan_in))."""
    ks = jax.random.split(key, 8)
    u = lambda k, shape, fan_in: jax.random.uniform(
        k, shape, jnp.float32, -1.0 / math.sqrt(fan_in), 1.0 / math.sqrt(fan_in))
    D = DIM
    return dict(
        wq=u(ks[0], (D, D), D), bq=u(ks[1], (D,), D),
        wk=u(ks[2], (D, D), D), bk=u(ks[3], (D,), D),
        wv=u(ks[4], (D, D), D), bv=u(ks[5], (D,), D),
        wo=u(ks[6], (D, D), D), bo=u(ks[7], (D,), D),
    )


def pack_params(params):
    """Pack all weights/biases + head lane masks into one flat f32 slab so the
    pallas_call issues only 3 HBM->VMEM DMAs (x, wslab, amask)."""
    g = lambda name: np.asarray(params[name], np.float32)
    slab = np.zeros((SLAB_ROWS, OUT_PAD), np.float32)
    slab[R_WQKV:R_WQKV + DIM, 0:QKV_DIM] = np.concatenate(
        [g('wq'), g('wk'), g('wv')], axis=1)
    slab[R_WO:R_WO + DIM, 0:DIM] = g('wo')            # lane-dense zero pad
    slab[R_BQKV, 0:QKV_DIM] = np.concatenate([g('bq'), g('bk'), g('bv')])
    slab[R_BO, 0:DIM] = g('bo')
    for h in range(NUM_HEADS):
        slab[R_HMASK + h, h * HEAD_DIM:(h + 1) * HEAD_DIM] = 1.0
    return jnp.asarray(slab)


def _build_additive_mask(mask):
    """Additive [N_ROWS, N_ROWS] mask over the flattened batch*seq rows:
    blocks cross-batch keys, padded keys and (optionally) user-masked keys."""
    r = jnp.arange(N_ROWS)
    bi, bj = r[:, None] // S_PAD, r[None, :] // S_PAD
    pi, pj = r[:, None] % S_PAD, r[None, :] % S_PAD
    allowed = (bi == bj) & (pj < SEQ)
    if mask is not None:
        m = jnp.asarray(mask)
        if m.ndim == 2:
            m = jnp.broadcast_to(m[None], (BATCH, SEQ, SEQ))
        mp = jnp.pad(m, ((0, 0), (0, S_PAD - SEQ), (0, S_PAD - SEQ)))
        allowed = allowed & (mp[bi, pi, pj] != 0)       # PyTorch: mask==0 blocked
    return jnp.where(allowed, 0.0, NEG_INF).astype(jnp.float32)


@jax.jit
def mha_forward(x, wslab, mask=None):
    """x: [BATCH, SEQ, DIM] f32 -> [BATCH, SEQ, DIM] f32."""
    B, S, D = x.shape
    assert (B, S, D) == (BATCH, SEQ, DIM)
    # pad seq to a sublane multiple and collapse batch so every in-kernel
    # matmul is a single 2-D [B*S_PAD, K] @ [K, N] MXU op.
    xp = jnp.pad(x.astype(jnp.float32), ((0, 0), (0, S_PAD - S), (0, 0)))
    xp = xp.reshape(B * S_PAD, DIM)
    amask = _build_additive_mask(mask)

    vmem = pl.BlockSpec(memory_space=pltpu.MemorySpace.VMEM)
    out = pl.pallas_call(
        mha_kernel,
        out_shape=jax.ShapeDtypeStruct((B * S_PAD, OUT_PAD), jnp.float32),
        in_specs=[vmem, vmem, vmem],
        out_specs=vmem,
    )(xp, wslab, amask)                                 # [B*S_PAD, 128]

    return out.reshape(B, S_PAD, OUT_PAD)[:, :S, :DIM]


def mha_reference(x, params, mask=None):
    """Pure-JAX reference of the same (dropout-free) forward pass."""
    B, S, D = x.shape
    H, Hd = NUM_HEADS, HEAD_DIM
    q = x @ params['wq'] + params['bq']
    k = x @ params['wk'] + params['bk']
    v = x @ params['wv'] + params['bv']
    q = q.reshape(B, S, H, Hd).transpose(0, 2, 1, 3)
    k = k.reshape(B, S, H, Hd).transpose(0, 2, 1, 3)
    v = v.reshape(B, S, H, Hd).transpose(0, 2, 1, 3)
    scores = jnp.einsum('bhqd,bhkd->bhqk', q, k) / math.sqrt(Hd)
    if mask is not None:
        m = jnp.asarray(mask)
        if m.ndim == 2:
            m = m[None, None]
        else:
            m = m[:, None]
        scores = jnp.where(m == 0, NEG_INF, scores)
    p = jax.nn.softmax(scores, axis=-1)
    attn = jnp.einsum('bhqk,bhkd->bhqd', p, v)
    attn = attn.transpose(0, 2, 1, 3).reshape(B, S, D)
    return attn @ params['wo'] + params['bo']


if __name__ == "__main__":
    key = jax.random.PRNGKey(0)
    kp, kx = jax.random.split(key)
    params = build_params(kp)
    wslab = pack_params(params)

    x = jax.random.normal(kx, (BATCH, SEQ, DIM), jnp.float32)

    # --- default path: mask=None (module's default forward) ---
    out = jax.block_until_ready(mha_forward(x, wslab, None))
    assert out.shape == (BATCH, SEQ, DIM)
    assert out.dtype == jnp.float32
    ref = jax.block_until_ready(mha_reference(x, params, None))
    # slightly relaxed tolerance: softmax uses the EUP approx reciprocal
    np.testing.assert_allclose(np.asarray(out), np.asarray(ref),
                               rtol=2e-3, atol=2e-3)

    # --- masked path: causal mask, exercising masked_fill(mask == 0, -1e9) ---
    causal = (jnp.arange(SEQ)[None, :] <= jnp.arange(SEQ)[:, None]
              ).astype(jnp.float32)
    out_m = jax.block_until_ready(mha_forward(x, wslab, causal))
    ref_m = jax.block_until_ready(mha_reference(x, params, causal))
    np.testing.assert_allclose(np.asarray(out_m), np.asarray(ref_m),
                               rtol=2e-3, atol=2e-3)

    print("KERNEL_OK")
</pallas_src>

<mosaic_0001>
module attributes {stable_mosaic.version = 11 : i64} {
  func.func @mha_kernel(%arg0: memref<32x12xf32, #tpu.memory_space<vmem>>, %arg1: memref<40x128xf32, #tpu.memory_space<vmem>>, %arg2: memref<32x32xf32, #tpu.memory_space<vmem>>, %arg3: memref<32x128xf32, #tpu.memory_space<vmem>>) attributes {dimension_semantics = [], scalar_prefetch = 0 : i64, scratch_operands = 0 : i64, tpu.core_type = #tpu.core_type<tc>} {
    %c0 = arith.constant 0 : index
    %c0_0 = arith.constant 0 : index
    %0 = vector.load %arg0[%c0, %c0_0] : memref<32x12xf32, #tpu.memory_space<vmem>>, vector<32x12xf32>
    %c0_1 = arith.constant 0 : index
    %c0_2 = arith.constant 0 : index
    %1 = vector.load %arg2[%c0_1, %c0_2] : memref<32x32xf32, #tpu.memory_space<vmem>>, vector<32x32xf32>
    %c34 = arith.constant 34 : index
    %c0_3 = arith.constant 0 : index
    %2 = vector.load %arg1[%c34, %c0_3] : memref<40x128xf32, #tpu.memory_space<vmem>>, vector<1x12xf32>
    %3 = vector.shape_cast %2 : vector<1x12xf32> to vector<1x12xf32>
    %4 = vector.broadcast %3 : vector<1x12xf32> to vector<32x12xf32>
    %c35 = arith.constant 35 : index
    %c0_4 = arith.constant 0 : index
    %5 = vector.load %arg1[%c35, %c0_4] : memref<40x128xf32, #tpu.memory_space<vmem>>, vector<1x12xf32>
    %6 = vector.shape_cast %5 : vector<1x12xf32> to vector<1x12xf32>
    %7 = vector.broadcast %6 : vector<1x12xf32> to vector<32x12xf32>
    %c36 = arith.constant 36 : index
    %c0_5 = arith.constant 0 : index
    %8 = vector.load %arg1[%c36, %c0_5] : memref<40x128xf32, #tpu.memory_space<vmem>>, vector<1x12xf32>
    %9 = vector.shape_cast %8 : vector<1x12xf32> to vector<1x12xf32>
    %10 = vector.broadcast %9 : vector<1x12xf32> to vector<32x12xf32>
    %c0_6 = arith.constant 0 : index
    %c0_7 = arith.constant 0 : index
    %11 = vector.load %arg1[%c0_6, %c0_7] : memref<40x128xf32, #tpu.memory_space<vmem>>, vector<12x36xf32>
    %c32 = arith.constant 32 : index
    %c0_8 = arith.constant 0 : index
    %12 = vector.load %arg1[%c32, %c0_8] : memref<40x128xf32, #tpu.memory_space<vmem>>, vector<1x36xf32>
    %cst = arith.constant dense<0.000000e+00> : vector<32x36xf32>
    %13 = tpu.matmul %0, %11, %cst {dimension_numbers = #tpu.dot_dimension_numbers<[1], [0], [0], [1], [0, 0, 1, 1], [], []>} : vector<32x12xf32>, vector<12x36xf32>, vector<32x36xf32> -> vector<32x36xf32>
    %14 = vector.broadcast %12 : vector<1x36xf32> to vector<32x36xf32>
    %15 = arith.addf %13, %14 : vector<32x36xf32>
    %16 = vector.extract_strided_slice %15 {offsets = [0, 0], sizes = [32, 12], strides = [1, 1]} : vector<32x36xf32> to vector<32x12xf32>
    %17 = vector.extract_strided_slice %15 {offsets = [0, 12], sizes = [32, 12], strides = [1, 1]} : vector<32x36xf32> to vector<32x12xf32>
    %18 = vector.extract_strided_slice %15 {offsets = [0, 24], sizes = [32, 12], strides = [1, 1]} : vector<32x36xf32> to vector<32x12xf32>
    %cst_9 = arith.constant 0.000000e+00 : f32
    %19 = vector.broadcast %cst_9 : f32 to vector<32x12xf32>
    %20 = arith.mulf %16, %4 : vector<32x12xf32>
    %cst_10 = arith.constant dense<0.000000e+00> : vector<32x32xf32>
    %21 = tpu.matmul %20, %17, %cst_10 {dimension_numbers = #tpu.dot_dimension_numbers<[1], [1], [0], [0], [0, 0, 1, 0], [], []>} : vector<32x12xf32>, vector<32x12xf32>, vector<32x32xf32> -> vector<32x32xf32>
    %cst_11 = arith.constant 5.000000e-01 : f32
    %22 = vector.broadcast %cst_11 : f32 to vector<32x32xf32>
    %23 = arith.mulf %21, %22 : vector<32x32xf32>
    %24 = arith.addf %23, %1 : vector<32x32xf32>
    %cst_12 = arith.constant dense<0xFF800000> : vector<32xf32>
    %25 = vector.multi_reduction <maximumf>, %24, %cst_12 [1] : vector<32x32xf32> to vector<32xf32>
    %26 = vector.shape_cast %25 : vector<32xf32> to vector<32x1xf32>
    %27 = vector.broadcast %26 : vector<32x1xf32> to vector<32x32xf32>
    %28 = arith.subf %24, %27 : vector<32x32xf32>
    %29 = math.exp %28 : vector<32x32xf32>
    %cst_13 = arith.constant dense<0.000000e+00> : vector<32xf32>
    %30 = vector.multi_reduction <add>, %29, %cst_13 [1] : vector<32x32xf32> to vector<32xf32>
    %31 = vector.shape_cast %30 : vector<32xf32> to vector<32x1xf32>
    %32 = tpu.reciprocal %31 {approx = true} : vector<32x1xf32> -> vector<32x1xf32>
    %33 = vector.broadcast %32 : vector<32x1xf32> to vector<32x32xf32>
    %34 = arith.mulf %29, %33 : vector<32x32xf32>
    %cst_14 = arith.constant dense<0.000000e+00> : vector<32x12xf32>
    %35 = tpu.matmul %34, %18, %cst_14 {dimension_numbers = #tpu.dot_dimension_numbers<[1], [0], [0], [1], [0, 0, 1, 1], [], []>} : vector<32x32xf32>, vector<32x12xf32>, vector<32x12xf32> -> vector<32x12xf32>
    %36 = arith.mulf %35, %4 : vector<32x12xf32>
    %37 = arith.addf %19, %36 : vector<32x12xf32>
    %38 = arith.mulf %16, %7 : vector<32x12xf32>
    %cst_15 = arith.constant dense<0.000000e+00> : vector<32x32xf32>
    %39 = tpu.matmul %38, %17, %cst_15 {dimension_numbers = #tpu.dot_dimension_numbers<[1], [1], [0], [0], [0, 0, 1, 0], [], []>} : vector<32x12xf32>, vector<32x12xf32>, vector<32x32xf32> -> vector<32x32xf32>
    %cst_16 = arith.constant 5.000000e-01 : f32
    %40 = vector.broadcast %cst_16 : f32 to vector<32x32xf32>
    %41 = arith.mulf %39, %40 : vector<32x32xf32>
    %42 = arith.addf %41, %1 : vector<32x32xf32>
    %cst_17 = arith.constant dense<0xFF800000> : vector<32xf32>
    %43 = vector.multi_reduction <maximumf>, %42, %cst_17 [1] : vector<32x32xf32> to vector<32xf32>
    %44 = vector.shape_cast %43 : vector<32xf32> to vector<32x1xf32>
    %45 = vector.broadcast %44 : vector<32x1xf32> to vector<32x32xf32>
    %46 = arith.subf %42, %45 : vector<32x32xf32>
    %47 = math.exp %46 : vector<32x32xf32>
    %cst_18 = arith.constant dense<0.000000e+00> : vector<32xf32>
    %48 = vector.multi_reduction <add>, %47, %cst_18 [1] : vector<32x32xf32> to vector<32xf32>
    %49 = vector.shape_cast %48 : vector<32xf32> to vector<32x1xf32>
    %50 = tpu.reciprocal %49 {approx = true} : vector<32x1xf32> -> vector<32x1xf32>
    %51 = vector.broadcast %50 : vector<32x1xf32> to vector<32x32xf32>
    %52 = arith.mulf %47, %51 : vector<32x32xf32>
    %cst_19 = arith.constant dense<0.000000e+00> : vector<32x12xf32>
    %53 = tpu.matmul %52, %18, %cst_19 {dimension_numbers = #tpu.dot_dimension_numbers<[1], [0], [0], [1], [0, 0, 1, 1], [], []>} : vector<32x32xf32>, vector<32x12xf32>, vector<32x12xf32> -> vector<32x12xf32>
    %54 = arith.mulf %53, %7 : vector<32x12xf32>
    %55 = arith.addf %37, %54 : vector<32x12xf32>
    %56 = arith.mulf %16, %10 : vector<32x12xf32>
    %cst_20 = arith.constant dense<0.000000e+00> : vector<32x32xf32>
    %57 = tpu.matmul %56, %17, %cst_20 {dimension_numbers = #tpu.dot_dimension_numbers<[1], [1], [0], [0], [0, 0, 1, 0], [], []>} : vector<32x12xf32>, vector<32x12xf32>, vector<32x32xf32> -> vector<32x32xf32>
    %cst_21 = arith.constant 5.000000e-01 : f32
    %58 = vector.broadcast %cst_21 : f32 to vector<32x32xf32>
    %59 = arith.mulf %57, %58 : vector<32x32xf32>
    %60 = arith.addf %59, %1 : vector<32x32xf32>
    %cst_22 = arith.constant dense<0xFF800000> : vector<32xf32>
    %61 = vector.multi_reduction <maximumf>, %60, %cst_22 [1] : vector<32x32xf32> to vector<32xf32>
    %62 = vector.shape_cast %61 : vector<32xf32> to vector<32x1xf32>
    %63 = vector.broadcast %62 : vector<32x1xf32> to vector<32x32xf32>
    %64 = arith.subf %60, %63 : vector<32x32xf32>
    %65 = math.exp %64 : vector<32x32xf32>
    %cst_23 = arith.constant dense<0.000000e+00> : vector<32xf32>
    %66 = vector.multi_reduction <add>, %65, %cst_23 [1] : vector<32x32xf32> to vector<32xf32>
    %67 = vector.shape_cast %66 : vector<32xf32> to vector<32x1xf32>
    %68 = tpu.reciprocal %67 {approx = true} : vector<32x1xf32> -> vector<32x1xf32>
    %69 = vector.broadcast %68 : vector<32x1xf32> to vector<32x32xf32>
    %70 = arith.mulf %65, %69 : vector<32x32xf32>
    %cst_24 = arith.constant dense<0.000000e+00> : vector<32x12xf32>
    %71 = tpu.matmul %70, %18, %cst_24 {dimension_numbers = #tpu.dot_dimension_numbers<[1], [0], [0], [1], [0, 0, 1, 1], [], []>} : vector<32x32xf32>, vector<32x12xf32>, vector<32x12xf32> -> vector<32x12xf32>
    %72 = arith.mulf %71, %10 : vector<32x12xf32>
    %73 = arith.addf %55, %72 : vector<32x12xf32>
    %c16 = arith.constant 16 : index
    %c0_25 = arith.constant 0 : index
    %74 = vector.load %arg1[%c16, %c0_25] : memref<40x128xf32, #tpu.memory_space<vmem>>, vector<12x128xf32>
    %c33 = arith.constant 33 : index
    %c0_26 = arith.constant 0 : index
    %75 = vector.load %arg1[%c33, %c0_26] : memref<40x128xf32, #tpu.memory_space<vmem>>, vector<1x128xf32>
    %cst_27 = arith.constant dense<0.000000e+00> : vector<32x128xf32>
    %76 = tpu.matmul %73, %74, %cst_27 {dimension_numbers = #tpu.dot_dimension_numbers<[1], [0], [0], [1], [0, 0, 1, 1], [], []>} : vector<32x12xf32>, vector<12x128xf32>, vector<32x128xf32> -> vector<32x128xf32>
    %77 = vector.broadcast %75 : vector<1x128xf32> to vector<32x128xf32>
    %78 = arith.addf %76, %77 : vector<32x128xf32>
    %c0_28 = arith.constant 0 : index
    %c0_29 = arith.constant 0 : index
    %79 = vector.load %arg3[%c0_28, %c0_29] : memref<32x128xf32, #tpu.memory_space<vmem>>, vector<32x128xf32>
    tpu.vector_store %arg3[%c0_28, %c0_29], %78 {strides = array<i32>} : memref<32x128xf32, #tpu.memory_space<vmem>>, vector<32x128xf32>,
    return
  }
}

</mosaic_0001>

<llo_original>
// kernel: mha_forward.1
$region0: #{mha_forward.1}
  #allocation0 [shape = 'u32[]', space=smem, size = 0x4, offset = 0x4, fixed_abs, tag = 'smem constant byte address 0x4 - core index']
  #allocation1 [shape = 'u32[144,128]{1,0:T(1,128)}', space=vmem, size = 0x12000, scoped, tag = 'internal scratch']
  %s0 = inlined_call_operand.vmem [shape: f32[32,12], index: 0, kind: input, shape index: {}]
  %s1 = inlined_call_operand.vmem [shape: f32[40,128], index: 1, kind: input, shape index: {}]
  %s2 = inlined_call_operand.vmem [shape: f32[32,32], index: 2, kind: input, shape index: {}]
  %s3 = inlined_call_operand.vmem [shape: f32[32,128], index: 3, kind: output, shape index: {}]
  %s4 = sld [smem:[#allocation0]]
  $region22: #{mha_forward.1} parent=0
    _
  %s6 = ssub.s32 1, %s4
  %s7 = scalar_select 0, %s6, %s4
  // Predicated region
  $region2: #{mha_forward.1} parent=0 // pred_check
    _
  $region3: #{mha_forward.1} parent=0 // pred_check_branch
    %9 = sbr.rel (0) target = $region5
  $region4: #{mha_forward.1} parent=0 // pred_region
    _
  $region5: #{mha_forward.1} parent=0 // pred_fallthru
    _
  // Predicated region
  $region6: #{mha_forward.1} parent=0 // pred_check
    _
  $region7: #{mha_forward.1} parent=0 // pred_check_branch
    %11 = sbr.rel (0) target = $region9
  $region8: #{mha_forward.1} parent=0 // pred_region
    _
  $region9: #{mha_forward.1} parent=0 // pred_fallthru
    _
  // Predicated region
  $region10: #{mha_forward.1} parent=0 // pred_check
    _
  $region11: #{mha_forward.1} parent=0 // pred_check_branch
    %13 = sbr.rel (0) target = $region13
  $region12: #{mha_forward.1} parent=0 // pred_region
    _
  $region13: #{mha_forward.1} parent=0 // pred_fallthru
    _
  %v14 = vld [vmem:[%s0] sm:$0xff]
  %v15 = vld [vmem:[%s0 + $0x8] sm:$0xff]
  %v16 = vld [vmem:[%s0 + $0x10] sm:$0xff]
  %v17 = vld [vmem:[%s0 + $0x18] sm:$0xff]
  %v18 = vld [vmem:[%s2] sm:$0xff]
  %v19 = vld [vmem:[%s2 + $0x8] sm:$0xff]
  %v20 = vld [vmem:[%s2 + $0x10] sm:$0xff]
  %v21 = vld [vmem:[%s2 + $0x18] sm:$0xff]
  %v22 = vld [vmem:[%s1 + $0x22] sm:$0x1]
  %v23 = vlaneseq
  %v24 = vshrl.u32 %v23, 7
  %v25 = vsub.s32 0, %v24
  %v26 = vrot.slane %v22, %v25
  %v27 = vld [vmem:[%s1 + $0x23] sm:$0x1]
  %v28 = vlaneseq
  %v29 = vshrl.u32 %v28, 7
  %v30 = vsub.s32 0, %v29
  %v31 = vrot.slane %v27, %v30
  %v32 = vld [vmem:[%s1 + $0x24] sm:$0x1]
  %v33 = vlaneseq
  %v34 = vshrl.u32 %v33, 7
  %v35 = vsub.s32 0, %v34
  %v36 = vrot.slane %v32, %v35
  %v37 = vld [vmem:[%s1] sm:$0xff]
  %v38 = vld [vmem:[%s1 + $0x8] sm:$0xf]
  %v39 = vld [vmem:[%s1 + $0x20] sm:$0x1]
  %v40 = vlaneseq
  %v41 = vshrl.u32 %v40, 7
  %v42 = vsub.s32 0, %v41
  %v43 = vrot.slane %v39, %v42
  %vm44 = vcmask 97280
  %v46 = vsel %vm44, %v14, 0
  %v49 = vsel %vm44, %v15, 0
  %v52 = vsel %vm44, %v16, 0
  %v55 = vsel %vm44, %v17, 0
  %vm57 = vcmask 1043456
  %v59 = vsel %vm57, %v38, 0
  %61 = vmatprep.subr.mxu0 0.0
  %62 = vmatpush1.msra.mxu0 0.0
  %63 = vmatprep.subr.mxu0 0.0
  %64 = vmatpush1.msra.mxu0 0.0
  %65 = vmatprep.subr.mxu0 0.0
  %66 = vmatpush1.msra.mxu0 0.0
  %67 = vmatprep.subr.mxu0 0.0
  %68 = vmatpush1.msra.mxu0 0.0
  %69 = vmatprep.subr.mxu0 0.0
  %70 = vmatpush1.msra.mxu0 0.0
  %71 = vmatprep.subr.mxu0 0.0
  %72 = vmatpush1.msra.mxu0 0.0
  %73 = vmatprep.subr.mxu0 0.0
  %74 = vmatpush1.msra.mxu0 0.0
  %75 = vmatprep.subr.mxu0 0.0
  %76 = vmatpush1.msra.mxu0 0.0
  %77 = vmatprep.subr.mxu0 0.0
  %78 = vmatpush1.msra.mxu0 0.0
  %79 = vmatprep.subr.mxu0 0.0
  %80 = vmatpush1.msra.mxu0 0.0
  %81 = vmatprep.subr.mxu0 0.0
  %82 = vmatpush1.msra.mxu0 0.0
  %83 = vmatprep.subr.mxu0 0.0
  %84 = vmatpush1.msra.mxu0 0.0
  %85 = vmatprep.subr.mxu0 0.0
  %86 = vmatpush1.msra.mxu0 0.0
  %87 = vmatprep.subr.mxu0 0.0
  %88 = vmatpush1.msra.mxu0 0.0
  %89 = vmatprep.subr.mxu0 0.0
  %90 = vmatpush1.msra.mxu0 %v59
  %91 = vmatprep.subr.mxu0 0.0
  %92 = vmatpush1.msra.mxu0 %v37
  %93 = vmatprep.subr.mxu0 0.0
  %94 = vmatpush2.msra.mxu0 0.0
  %95 = vmatprep.subr.mxu0 0.0
  %96 = vmatpush2.msra.mxu0 0.0
  %97 = vmatprep.subr.mxu0 0.0
  %98 = vmatpush2.msra.mxu0 0.0
  %99 = vmatprep.subr.mxu0 0.0
  %100 = vmatpush2.msra.mxu0 0.0
  %101 = vmatprep.subr.mxu0 0.0
  %102 = vmatpush2.msra.mxu0 0.0
  %103 = vmatprep.subr.mxu0 0.0
  %104 = vmatpush2.msra.mxu0 0.0
  %105 = vmatprep.subr.mxu0 0.0
  %106 = vmatpush2.msra.mxu0 0.0
  %107 = vmatprep.subr.mxu0 0.0
  %108 = vmatpush2.msra.mxu0 0.0
  %109 = vmatprep.subr.mxu0 0.0
  %110 = vmatpush2.msra.mxu0 0.0
  %111 = vmatprep.subr.mxu0 0.0
  %112 = vmatpush2.msra.mxu0 0.0
  %113 = vmatprep.subr.mxu0 0.0
  %114 = vmatpush2.msra.mxu0 0.0
  %115 = vmatprep.subr.mxu0 0.0
  %116 = vmatpush2.msra.mxu0 0.0
  %117 = vmatprep.subr.mxu0 0.0
  %118 = vmatpush2.msra.mxu0 0.0
  %119 = vmatprep.subr.mxu0 0.0
  %120 = vmatpush2.msra.mxu0 0.0
  %121 = vmatprep.subr.mxu0 0.0
  %122 = vmatpush2.msra.mxu0 0.0
  %123 = vmatprep.subr.mxu0 0.0
  %124 = vmatpush2.msra.mxu0 0.0
  %125 = vmatprep.mubr.f32.mxu0 0.0
  %126 = vmatmul.mubr.f32.gmra.mxu0 %v46
  %v127 = vpop.f32.mrf.mxu0
  %v128 = vadd.f32 %v43, %v127
  %v129 = vpop.f32.mrf.mxu0
  %130 = vmatprep.mubr.f32.mxu0 0.0
  %131 = vmatmul.mubr.f32.gmra.mxu0 %v49
  %v132 = vpop.f32.mrf.mxu0
  %v133 = vadd.f32 %v43, %v132
  %v134 = vpop.f32.mrf.mxu0
  %135 = vmatprep.mubr.f32.mxu0 0.0
  %136 = vmatmul.mubr.f32.gmra.mxu0 %v52
  %v137 = vpop.f32.mrf.mxu0
  %v138 = vadd.f32 %v43, %v137
  %v139 = vpop.f32.mrf.mxu0
  %140 = vmatprep.mubr.f32.mxu0 0.0
  %141 = vmatmul.mubr.f32.gmra.mxu0 %v55
  %v142 = vpop.f32.mrf.mxu0
  %v143 = vadd.f32 %v43, %v142
  %v144 = vpop.f32.mrf.mxu0
  %145 = vdwg.mxu0
  %v146 = vmul.f32 %v128, %v26
  %v147 = vmul.f32 %v133, %v26
  %v148 = vmul.f32 %v138, %v26
  %v149 = vmul.f32 %v143, %v26
  %154 = vrot.lane.b32.xlu0 %v128, 116
  %v155 = vpop.permute.xlu0 %154
  %156 = vrot.lane.b32.xlu0 %v133, 116
  %v157 = vpop.permute.xlu0 %156
  %158 = vrot.lane.b32.xlu0 %v138, 116
  %v159 = vpop.permute.xlu0 %158
  %160 = vrot.lane.b32.xlu0 %v143, 116
  %v161 = vpop.permute.xlu0 %160
  %v163 = vsel %vm44, %v146, 0
  %v166 = vsel %vm44, %v147, 0
  %v169 = vsel %vm44, %v148, 0
  %v172 = vsel %vm44, %v149, 0
  %v174 = vsel %vm44, %v155, 0
  %v176 = vsel %vm44, %v157, 0
  %v178 = vsel %vm44, %v159, 0
  %v180 = vsel %vm44, %v161, 0
  %182 = vmatprep.subr.mxu0 0.0
  %183 = vmatpush1.xpose.msra.mxu0 0.0
  %184 = vmatprep.subr.mxu0 0.0
  %185 = vmatpush1.xpose.msra.mxu0 0.0
  %186 = vmatprep.subr.mxu0 0.0
  %187 = vmatpush1.xpose.msra.mxu0 0.0
  %188 = vmatprep.subr.mxu0 0.0
  %189 = vmatpush1.xpose.msra.mxu0 0.0
  %190 = vmatprep.subr.mxu0 0.0
  %191 = vmatpush1.xpose.msra.mxu0 0.0
  %192 = vmatprep.subr.mxu0 0.0
  %193 = vmatpush1.xpose.msra.mxu0 0.0
  %194 = vmatprep.subr.mxu0 0.0
  %195 = vmatpush1.xpose.msra.mxu0 0.0
  %196 = vmatprep.subr.mxu0 0.0
  %197 = vmatpush1.xpose.msra.mxu0 0.0
  %198 = vmatprep.subr.mxu0 0.0
  %199 = vmatpush1.xpose.msra.mxu0 0.0
  %200 = vmatprep.subr.mxu0 0.0
  %201 = vmatpush1.xpose.msra.mxu0 0.0
  %202 = vmatprep.subr.mxu0 0.0
  %203 = vmatpush1.xpose.msra.mxu0 0.0
  %204 = vmatprep.subr.mxu0 0.0
  %205 = vmatpush1.xpose.msra.mxu0 0.0
  %206 = vmatprep.subr.mxu0 0.0
  %207 = vmatpush1.xpose.msra.mxu0 %v180
  %208 = vmatprep.subr.mxu0 0.0
  %209 = vmatpush1.xpose.msra.mxu0 %v178
  %210 = vmatprep.subr.mxu0 0.0
  %211 = vmatpush1.xpose.msra.mxu0 %v176
  %212 = vmatprep.subr.mxu0 0.0
  %213 = vmatpush1.xpose.msra.mxu0 %v174
  %214 = vmatprep.subr.mxu0 0.0
  %215 = vmatpush2.xpose.msra.mxu0 0.0
  %216 = vmatprep.subr.mxu0 0.0
  %217 = vmatpush2.xpose.msra.mxu0 0.0
  %218 = vmatprep.subr.mxu0 0.0
  %219 = vmatpush2.xpose.msra.mxu0 0.0
  %220 = vmatprep.subr.mxu0 0.0
  %221 = vmatpush2.xpose.msra.mxu0 0.0
  %222 = vmatprep.subr.mxu0 0.0
  %223 = vmatpush2.xpose.msra.mxu0 0.0
  %224 = vmatprep.subr.mxu0 0.0
  %225 = vmatpush2.xpose.msra.mxu0 0.0
  %226 = vmatprep.subr.mxu0 0.0
  %227 = vmatpush2.xpose.msra.mxu0 0.0
  %228 = vmatprep.subr.mxu0 0.0
  %229 = vmatpush2.xpose.msra.mxu0 0.0
  %230 = vmatprep.subr.mxu0 0.0
  %231 = vmatpush2.xpose.msra.mxu0 0.0
  %232 = vmatprep.subr.mxu0 0.0
  %233 = vmatpush2.xpose.msra.mxu0 0.0
  %234 = vmatprep.subr.mxu0 0.0
  %235 = vmatpush2.xpose.msra.mxu0 0.0
  %236 = vmatprep.subr.mxu0 0.0
  %237 = vmatpush2.xpose.msra.mxu0 0.0
  %238 = vmatprep.subr.mxu0 0.0
  %239 = vmatpush2.xpose.msra.mxu0 0.0
  %240 = vmatprep.subr.mxu0 0.0
  %241 = vmatpush2.xpose.msra.mxu0 0.0
  %242 = vmatprep.subr.mxu0 0.0
  %243 = vmatpush2.xpose.msra.mxu0 0.0
  %244 = vmatprep.subr.mxu0 0.0
  %245 = vmatpush2.xpose.msra.mxu0 0.0
  %246 = vmatprep.mubr.f32.mxu0 0.0
  %247 = vmatmul.mubr.f32.gmra.mxu0 %v163
  %v248 = vpop.f32.mrf.mxu0
  %v249 = vadd.f32 0.0, %v248
  %v250 = vpop.f32.mrf.mxu0
  %251 = vmatprep.mubr.f32.mxu0 0.0
  %252 = vmatmul.mubr.f32.gmra.mxu0 %v166
  %v253 = vpop.f32.mrf.mxu0
  %v254 = vadd.f32 0.0, %v253
  %v255 = vpop.f32.mrf.mxu0
  %256 = vmatprep.mubr.f32.mxu0 0.0
  %257 = vmatmul.mubr.f32.gmra.mxu0 %v169
  %v258 = vpop.f32.mrf.mxu0
  %v259 = vadd.f32 0.0, %v258
  %v260 = vpop.f32.mrf.mxu0
  %261 = vmatprep.mubr.f32.mxu0 0.0
  %262 = vmatmul.mubr.f32.gmra.mxu0 %v172
  %v263 = vpop.f32.mrf.mxu0
  %v264 = vadd.f32 0.0, %v263
  %v265 = vpop.f32.mrf.mxu0
  %266 = vdwg.mxu0
  %v267 = vmul.f32 %v249, 0.5
  %v268 = vmul.f32 %v254, 0.5
  %v269 = vmul.f32 %v259, 0.5
  %v270 = vmul.f32 %v264, 0.5
  %v271 = vadd.f32 %v267, %v18
  %v272 = vadd.f32 %v268, %v19
  %v273 = vadd.f32 %v269, %v20
  %v274 = vadd.f32 %v270, %v21
  %vm275 = vcmask 261120
  %v276 = vsel %vm275, %v271, -inf
  %277 = vmax.xlane.f32.xlu0 %v276
  %v278 = vpop.xlane.xlu0 %277
  %v279 = vsel %vm275, %v272, -inf
  %280 = vmax.xlane.f32.xlu0 %v279
  %v281 = vpop.xlane.xlu0 %280
  %v282 = vsel %vm275, %v273, -inf
  %283 = vmax.xlane.f32.xlu0 %v282
  %v284 = vpop.xlane.xlu0 %283
  %v285 = vsel %vm275, %v274, -inf
  %286 = vmax.xlane.f32.xlu0 %v285
  %v287 = vpop.xlane.xlu0 %286
  %v288 = vsub.f32 %v271, %v278
  %v289 = vsub.f32 %v272, %v281
  %v290 = vsub.f32 %v273, %v284
  %v291 = vsub.f32 %v274, %v287
  %v292 = vmul.f32 %v288, 1.442695
  %v293 = vpow.pop %v292
  %v294 = vmul.f32 %v289, 1.442695
  %v295 = vpow.pop %v294
  %v296 = vmul.f32 %v290, 1.442695
  %v297 = vpow.pop %v296
  %v298 = vmul.f32 %v291, 1.442695
  %v299 = vpow.pop %v298
  %v300 = vsel %vm275, %v293, 0.0
  %301 = vadd.xlane.f32.xlu0 %v300
  %v302 = vpop.xlane.xlu0 %301
  %v303 = vsel %vm275, %v295, 0.0
  %304 = vadd.xlane.f32.xlu0 %v303
  %v305 = vpop.xlane.xlu0 %304
  %v306 = vsel %vm275, %v297, 0.0
  %307 = vadd.xlane.f32.xlu0 %v306
  %v308 = vpop.xlane.xlu0 %307
  %v309 = vsel %vm275, %v299, 0.0
  %310 = vadd.xlane.f32.xlu0 %v309
  %v311 = vpop.xlane.xlu0 %310
  %v312 = vrcp.pop %v302
  %v313 = vrcp.pop %v305
  %v314 = vrcp.pop %v308
  %v315 = vrcp.pop %v311
  %v316 = vmul.f32 %v293, %v312
  %v317 = vmul.f32 %v295, %v313
  %v318 = vmul.f32 %v297, %v314
  %v319 = vmul.f32 %v299, %v315
  %320 = vrot.lane.b32.xlu0 %v128, 104
  %v321 = vpop.permute.xlu0 %320
  %322 = vrot.lane.b32.xlu0 %v133, 104
  %v323 = vpop.permute.xlu0 %322
  %324 = vrot.lane.b32.xlu0 %v138, 104
  %v325 = vpop.permute.xlu0 %324
  %326 = vrot.lane.b32.xlu0 %v143, 104
  %v327 = vpop.permute.xlu0 %326
  %v333 = vsel %vm275, %v316, 0
  %v336 = vsel %vm275, %v317, 0
  %v339 = vsel %vm275, %v318, 0
  %v342 = vsel %vm275, %v319, 0
  %344 = vmatprep.subr.mxu0 0.0
  %345 = vmatpush1.msra.mxu0 0.0
  %346 = vmatprep.subr.mxu0 0.0
  %347 = vmatpush1.msra.mxu0 0.0
  %348 = vmatprep.subr.mxu0 0.0
  %349 = vmatpush1.msra.mxu0 0.0
  %350 = vmatprep.subr.mxu0 0.0
  %351 = vmatpush1.msra.mxu0 0.0
  %352 = vmatprep.subr.mxu0 0.0
  %353 = vmatpush1.msra.mxu0 0.0
  %354 = vmatprep.subr.mxu0 0.0
  %355 = vmatpush1.msra.mxu0 0.0
  %356 = vmatprep.subr.mxu0 0.0
  %357 = vmatpush1.msra.mxu0 0.0
  %358 = vmatprep.subr.mxu0 0.0
  %359 = vmatpush1.msra.mxu0 0.0
  %360 = vmatprep.subr.mxu0 0.0
  %361 = vmatpush1.msra.mxu0 0.0
  %362 = vmatprep.subr.mxu0 0.0
  %363 = vmatpush1.msra.mxu0 0.0
  %364 = vmatprep.subr.mxu0 0.0
  %365 = vmatpush1.msra.mxu0 0.0
  %366 = vmatprep.subr.mxu0 0.0
  %367 = vmatpush1.msra.mxu0 0.0
  %368 = vmatprep.subr.mxu0 0.0
  %369 = vmatpush1.msra.mxu0 %v327
  %370 = vmatprep.subr.mxu0 0.0
  %371 = vmatpush1.msra.mxu0 %v325
  %372 = vmatprep.subr.mxu0 0.0
  %373 = vmatpush1.msra.mxu0 %v323
  %374 = vmatprep.subr.mxu0 0.0
  %375 = vmatpush1.msra.mxu0 %v321
  %376 = vmatprep.subr.mxu0 0.0
  %377 = vmatpush2.msra.mxu0 0.0
  %378 = vmatprep.subr.mxu0 0.0
  %379 = vmatpush2.msra.mxu0 0.0
  %380 = vmatprep.subr.mxu0 0.0
  %381 = vmatpush2.msra.mxu0 0.0
  %382 = vmatprep.subr.mxu0 0.0
  %383 = vmatpush2.msra.mxu0 0.0
  %384 = vmatprep.subr.mxu0 0.0
  %385 = vmatpush2.msra.mxu0 0.0
  %386 = vmatprep.subr.mxu0 0.0
  %387 = vmatpush2.msra.mxu0 0.0
  %388 = vmatprep.subr.mxu0 0.0
  %389 = vmatpush2.msra.mxu0 0.0
  %390 = vmatprep.subr.mxu0 0.0
  %391 = vmatpush2.msra.mxu0 0.0
  %392 = vmatprep.subr.mxu0 0.0
  %393 = vmatpush2.msra.mxu0 0.0
  %394 = vmatprep.subr.mxu0 0.0
  %395 = vmatpush2.msra.mxu0 0.0
  %396 = vmatprep.subr.mxu0 0.0
  %397 = vmatpush2.msra.mxu0 0.0
  %398 = vmatprep.subr.mxu0 0.0
  %399 = vmatpush2.msra.mxu0 0.0
  %400 = vmatprep.subr.mxu0 0.0
  %401 = vmatpush2.msra.mxu0 0.0
  %402 = vmatprep.subr.mxu0 0.0
  %403 = vmatpush2.msra.mxu0 0.0
  %404 = vmatprep.subr.mxu0 0.0
  %405 = vmatpush2.msra.mxu0 0.0
  %406 = vmatprep.subr.mxu0 0.0
  %407 = vmatpush2.msra.mxu0 0.0
  %408 = vmatprep.mubr.f32.mxu0 0.0
  %409 = vmatmul.mubr.f32.gmra.mxu0 %v333
  %v410 = vpop.f32.mrf.mxu0
  %v411 = vadd.f32 0.0, %v410
  %v412 = vpop.f32.mrf.mxu0
  %413 = vmatprep.mubr.f32.mxu0 0.0
  %414 = vmatmul.mubr.f32.gmra.mxu0 %v336
  %v415 = vpop.f32.mrf.mxu0
  %v416 = vadd.f32 0.0, %v415
  %v417 = vpop.f32.mrf.mxu0
  %418 = vmatprep.mubr.f32.mxu0 0.0
  %419 = vmatmul.mubr.f32.gmra.mxu0 %v339
  %v420 = vpop.f32.mrf.mxu0
  %v421 = vadd.f32 0.0, %v420
  %v422 = vpop.f32.mrf.mxu0
  %423 = vmatprep.mubr.f32.mxu0 0.0
  %424 = vmatmul.mubr.f32.gmra.mxu0 %v342
  %v425 = vpop.f32.mrf.mxu0
  %v426 = vadd.f32 0.0, %v425
  %v427 = vpop.f32.mrf.mxu0
  %428 = vdwg.mxu0
  %v429 = vmul.f32 %v411, %v26
  %v430 = vmul.f32 %v416, %v26
  %v431 = vmul.f32 %v421, %v26
  %v432 = vmul.f32 %v426, %v26
  %v433 = vadd.f32 %v429, 0.0
  %v434 = vadd.f32 %v430, 0.0
  %v435 = vadd.f32 %v431, 0.0
  %v436 = vadd.f32 %v432, 0.0
  %v437 = vmul.f32 %v128, %v31
  %v438 = vmul.f32 %v133, %v31
  %v439 = vmul.f32 %v138, %v31
  %v440 = vmul.f32 %v143, %v31
  %v442 = vsel %vm44, %v437, 0
  %v445 = vsel %vm44, %v438, 0
  %v448 = vsel %vm44, %v439, 0
  %v451 = vsel %vm44, %v440, 0
  %453 = vmatprep.subr.mxu0 0.0
  %454 = vmatpush1.xpose.msra.mxu0 0.0
  %455 = vmatprep.subr.mxu0 0.0
  %456 = vmatpush1.xpose.msra.mxu0 0.0
  %457 = vmatprep.subr.mxu0 0.0
  %458 = vmatpush1.xpose.msra.mxu0 0.0
  %459 = vmatprep.subr.mxu0 0.0
  %460 = vmatpush1.xpose.msra.mxu0 0.0
  %461 = vmatprep.subr.mxu0 0.0
  %462 = vmatpush1.xpose.msra.mxu0 0.0
  %463 = vmatprep.subr.mxu0 0.0
  %464 = vmatpush1.xpose.msra.mxu0 0.0
  %465 = vmatprep.subr.mxu0 0.0
  %466 = vmatpush1.xpose.msra.mxu0 0.0
  %467 = vmatprep.subr.mxu0 0.0
  %468 = vmatpush1.xpose.msra.mxu0 0.0
  %469 = vmatprep.subr.mxu0 0.0
  %470 = vmatpush1.xpose.msra.mxu0 0.0
  %471 = vmatprep.subr.mxu0 0.0
  %472 = vmatpush1.xpose.msra.mxu0 0.0
  %473 = vmatprep.subr.mxu0 0.0
  %474 = vmatpush1.xpose.msra.mxu0 0.0
  %475 = vmatprep.subr.mxu0 0.0
  %476 = vmatpush1.xpose.msra.mxu0 0.0
  %477 = vmatprep.subr.mxu0 0.0
  %478 = vmatpush1.xpose.msra.mxu0 %v180
  %479 = vmatprep.subr.mxu0 0.0
  %480 = vmatpush1.xpose.msra.mxu0 %v178
  %481 = vmatprep.subr.mxu0 0.0
  %482 = vmatpush1.xpose.msra.mxu0 %v176
  %483 = vmatprep.subr.mxu0 0.0
  %484 = vmatpush1.xpose.msra.mxu0 %v174
  %485 = vmatprep.subr.mxu0 0.0
  %486 = vmatpush2.xpose.msra.mxu0 0.0
  %487 = vmatprep.subr.mxu0 0.0
  %488 = vmatpush2.xpose.msra.mxu0 0.0
  %489 = vmatprep.subr.mxu0 0.0
  %490 = vmatpush2.xpose.msra.mxu0 0.0
  %491 = vmatprep.subr.mxu0 0.0
  %492 = vmatpush2.xpose.msra.mxu0 0.0
  %493 = vmatprep.subr.mxu0 0.0
  %494 = vmatpush2.xpose.msra.mxu0 0.0
  %495 = vmatprep.subr.mxu0 0.0
  %496 = vmatpush2.xpose.msra.mxu0 0.0
  %497 = vmatprep.subr.mxu0 0.0
  %498 = vmatpush2.xpose.msra.mxu0 0.0
  %499 = vmatprep.subr.mxu0 0.0
  %500 = vmatpush2.xpose.msra.mxu0 0.0
  %501 = vmatprep.subr.mxu0 0.0
  %502 = vmatpush2.xpose.msra.mxu0 0.0
  %503 = vmatprep.subr.mxu0 0.0
  %504 = vmatpush2.xpose.msra.mxu0 0.0
  %505 = vmatprep.subr.mxu0 0.0
  %506 = vmatpush2.xpose.msra.mxu0 0.0
  %507 = vmatprep.subr.mxu0 0.0
  %508 = vmatpush2.xpose.msra.mxu0 0.0
  %509 = vmatprep.subr.mxu0 0.0
  %510 = vmatpush2.xpose.msra.mxu0 0.0
  %511 = vmatprep.subr.mxu0 0.0
  %512 = vmatpush2.xpose.msra.mxu0 0.0
  %513 = vmatprep.subr.mxu0 0.0
  %514 = vmatpush2.xpose.msra.mxu0 0.0
  %515 = vmatprep.subr.mxu0 0.0
  %516 = vmatpush2.xpose.msra.mxu0 0.0
  %517 = vmatprep.mubr.f32.mxu0 0.0
  %518 = vmatmul.mubr.f32.gmra.mxu0 %v442
  %v519 = vpop.f32.mrf.mxu0
  %v520 = vadd.f32 0.0, %v519
  %v521 = vpop.f32.mrf.mxu0
  %522 = vmatprep.mubr.f32.mxu0 0.0
  %523 = vmatmul.mubr.f32.gmra.mxu0 %v445
  %v524 = vpop.f32.mrf.mxu0
  %v525 = vadd.f32 0.0, %v524
  %v526 = vpop.f32.mrf.mxu0
  %527 = vmatprep.mubr.f32.mxu0 0.0
  %528 = vmatmul.mubr.f32.gmra.mxu0 %v448
  %v529 = vpop.f32.mrf.mxu0
  %v530 = vadd.f32 0.0, %v529
  %v531 = vpop.f32.mrf.mxu0
  %532 = vmatprep.mubr.f32.mxu0 0.0
  %533 = vmatmul.mubr.f32.gmra.mxu0 %v451
  %v534 = vpop.f32.mrf.mxu0
  %v535 = vadd.f32 0.0, %v534
  %v536 = vpop.f32.mrf.mxu0
  %537 = vdwg.mxu0
  %v538 = vmul.f32 %v520, 0.5
  %v539 = vmul.f32 %v525, 0.5
  %v540 = vmul.f32 %v530, 0.5
  %v541 = vmul.f32 %v535, 0.5
  %v542 = vadd.f32 %v538, %v18
  %v543 = vadd.f32 %v539, %v19
  %v544 = vadd.f32 %v540, %v20
  %v545 = vadd.f32 %v541, %v21
  %v546 = vsel %vm275, %v542, -inf
  %547 = vmax.xlane.f32.xlu0 %v546
  %v548 = vpop.xlane.xlu0 %547
  %v549 = vsel %vm275, %v543, -inf
  %550 = vmax.xlane.f32.xlu0 %v549
  %v551 = vpop.xlane.xlu0 %550
  %v552 = vsel %vm275, %v544, -inf
  %553 = vmax.xlane.f32.xlu0 %v552
  %v554 = vpop.xlane.xlu0 %553
  %v555 = vsel %vm275, %v545, -inf
  %556 = vmax.xlane.f32.xlu0 %v555
  %v557 = vpop.xlane.xlu0 %556
  %v558 = vsub.f32 %v542, %v548
  %v559 = vsub.f32 %v543, %v551
  %v560 = vsub.f32 %v544, %v554
  %v561 = vsub.f32 %v545, %v557
  %v562 = vmul.f32 %v558, 1.442695
  %v563 = vpow.pop %v562
  %v564 = vmul.f32 %v559, 1.442695
  %v565 = vpow.pop %v564
  %v566 = vmul.f32 %v560, 1.442695
  %v567 = vpow.pop %v566
  %v568 = vmul.f32 %v561, 1.442695
  %v569 = vpow.pop %v568
  %v570 = vsel %vm275, %v563, 0.0
  %571 = vadd.xlane.f32.xlu0 %v570
  %v572 = vpop.xlane.xlu0 %571
  %v573 = vsel %vm275, %v565, 0.0
  %574 = vadd.xlane.f32.xlu0 %v573
  %v575 = vpop.xlane.xlu0 %574
  %v576 = vsel %vm275, %v567, 0.0
  %577 = vadd.xlane.f32.xlu0 %v576
  %v578 = vpop.xlane.xlu0 %577
  %v579 = vsel %vm275, %v569, 0.0
  %580 = vadd.xlane.f32.xlu0 %v579
  %v581 = vpop.xlane.xlu0 %580
  %v582 = vrcp.pop %v572
  %v583 = vrcp.pop %v575
  %v584 = vrcp.pop %v578
  %v585 = vrcp.pop %v581
  %v586 = vmul.f32 %v563, %v582
  %v587 = vmul.f32 %v565, %v583
  %v588 = vmul.f32 %v567, %v584
  %v589 = vmul.f32 %v569, %v585
  %v591 = vsel %vm275, %v586, 0
  %v594 = vsel %vm275, %v587, 0
  %v597 = vsel %vm275, %v588, 0
  %v600 = vsel %vm275, %v589, 0
  %602 = vmatprep.subr.mxu0 0.0
  %603 = vmatpush1.msra.mxu0 0.0
  %604 = vmatprep.subr.mxu0 0.0
  %605 = vmatpush1.msra.mxu0 0.0
  %606 = vmatprep.subr.mxu0 0.0
  %607 = vmatpush1.msra.mxu0 0.0
  %608 = vmatprep.subr.mxu0 0.0
  %609 = vmatpush1.msra.mxu0 0.0
  %610 = vmatprep.subr.mxu0 0.0
  %611 = vmatpush1.msra.mxu0 0.0
  %612 = vmatprep.subr.mxu0 0.0
  %613 = vmatpush1.msra.mxu0 0.0
  %614 = vmatprep.subr.mxu0 0.0
  %615 = vmatpush1.msra.mxu0 0.0
  %616 = vmatprep.subr.mxu0 0.0
  %617 = vmatpush1.msra.mxu0 0.0
  %618 = vmatprep.subr.mxu0 0.0
  %619 = vmatpush1.msra.mxu0 0.0
  %620 = vmatprep.subr.mxu0 0.0
  %621 = vmatpush1.msra.mxu0 0.0
  %622 = vmatprep.subr.mxu0 0.0
  %623 = vmatpush1.msra.mxu0 0.0
  %624 = vmatprep.subr.mxu0 0.0
  %625 = vmatpush1.msra.mxu0 0.0
  %626 = vmatprep.subr.mxu0 0.0
  %627 = vmatpush1.msra.mxu0 %v327
  %628 = vmatprep.subr.mxu0 0.0
  %629 = vmatpush1.msra.mxu0 %v325
  %630 = vmatprep.subr.mxu0 0.0
  %631 = vmatpush1.msra.mxu0 %v323
  %632 = vmatprep.subr.mxu0 0.0
  %633 = vmatpush1.msra.mxu0 %v321
  %634 = vmatprep.subr.mxu0 0.0
  %635 = vmatpush2.msra.mxu0 0.0
  %636 = vmatprep.subr.mxu0 0.0
  %637 = vmatpush2.msra.mxu0 0.0
  %638 = vmatprep.subr.mxu0 0.0
  %639 = vmatpush2.msra.mxu0 0.0
  %640 = vmatprep.subr.mxu0 0.0
  %641 = vmatpush2.msra.mxu0 0.0
  %642 = vmatprep.subr.mxu0 0.0
  %643 = vmatpush2.msra.mxu0 0.0
  %644 = vmatprep.subr.mxu0 0.0
  %645 = vmatpush2.msra.mxu0 0.0
  %646 = vmatprep.subr.mxu0 0.0
  %647 = vmatpush2.msra.mxu0 0.0
  %648 = vmatprep.subr.mxu0 0.0
  %649 = vmatpush2.msra.mxu0 0.0
  %650 = vmatprep.subr.mxu0 0.0
  %651 = vmatpush2.msra.mxu0 0.0
  %652 = vmatprep.subr.mxu0 0.0
  %653 = vmatpush2.msra.mxu0 0.0
  %654 = vmatprep.subr.mxu0 0.0
  %655 = vmatpush2.msra.mxu0 0.0
  %656 = vmatprep.subr.mxu0 0.0
  %657 = vmatpush2.msra.mxu0 0.0
  %658 = vmatprep.subr.mxu0 0.0
  %659 = vmatpush2.msra.mxu0 0.0
  %660 = vmatprep.subr.mxu0 0.0
  %661 = vmatpush2.msra.mxu0 0.0
  %662 = vmatprep.subr.mxu0 0.0
  %663 = vmatpush2.msra.mxu0 0.0
  %664 = vmatprep.subr.mxu0 0.0
  %665 = vmatpush2.msra.mxu0 0.0
  %666 = vmatprep.mubr.f32.mxu0 0.0
  %667 = vmatmul.mubr.f32.gmra.mxu0 %v591
  %v668 = vpop.f32.mrf.mxu0
  %v669 = vadd.f32 0.0, %v668
  %v670 = vpop.f32.mrf.mxu0
  %671 = vmatprep.mubr.f32.mxu0 0.0
  %672 = vmatmul.mubr.f32.gmra.mxu0 %v594
  %v673 = vpop.f32.mrf.mxu0
  %v674 = vadd.f32 0.0, %v673
  %v675 = vpop.f32.mrf.mxu0
  %676 = vmatprep.mubr.f32.mxu0 0.0
  %677 = vmatmul.mubr.f32.gmra.mxu0 %v597
  %v678 = vpop.f32.mrf.mxu0
  %v679 = vadd.f32 0.0, %v678
  %v680 = vpop.f32.mrf.mxu0
  %681 = vmatprep.mubr.f32.mxu0 0.0
  %682 = vmatmul.mubr.f32.gmra.mxu0 %v600
  %v683 = vpop.f32.mrf.mxu0
  %v684 = vadd.f32 0.0, %v683
  %v685 = vpop.f32.mrf.mxu0
  %686 = vdwg.mxu0
  %v687 = vmul.f32 %v669, %v31
  %v688 = vmul.f32 %v674, %v31
  %v689 = vmul.f32 %v679, %v31
  %v690 = vmul.f32 %v684, %v31
  %v691 = vadd.f32 %v433, %v687
  %v692 = vadd.f32 %v434, %v688
  %v693 = vadd.f32 %v435, %v689
  %v694 = vadd.f32 %v436, %v690
  %v695 = vmul.f32 %v128, %v36
  %v696 = vmul.f32 %v133, %v36
  %v697 = vmul.f32 %v138, %v36
  %v698 = vmul.f32 %v143, %v36
  %v700 = vsel %vm44, %v695, 0
  %v703 = vsel %vm44, %v696, 0
  %v706 = vsel %vm44, %v697, 0
  %v709 = vsel %vm44, %v698, 0
  %711 = vmatprep.subr.mxu0 0.0
  %712 = vmatpush1.xpose.msra.mxu0 0.0
  %713 = vmatprep.subr.mxu0 0.0
  %714 = vmatpush1.xpose.msra.mxu0 0.0
  %715 = vmatprep.subr.mxu0 0.0
  %716 = vmatpush1.xpose.msra.mxu0 0.0
  %717 = vmatprep.subr.mxu0 0.0
  %718 = vmatpush1.xpose.msra.mxu0 0.0
  %719 = vmatprep.subr.mxu0 0.0
  %720 = vmatpush1.xpose.msra.mxu0 0.0
  %721 = vmatprep.subr.mxu0 0.0
  %722 = vmatpush1.xpose.msra.mxu0 0.0
  %723 = vmatprep.subr.mxu0 0.0
  %724 = vmatpush1.xpose.msra.mxu0 0.0
  %725 = vmatprep.subr.mxu0 0.0
  %726 = vmatpush1.xpose.msra.mxu0 0.0
  %727 = vmatprep.subr.mxu0 0.0
  %728 = vmatpush1.xpose.msra.mxu0 0.0
  %729 = vmatprep.subr.mxu0 0.0
  %730 = vmatpush1.xpose.msra.mxu0 0.0
  %731 = vmatprep.subr.mxu0 0.0
  %732 = vmatpush1.xpose.msra.mxu0 0.0
  %733 = vmatprep.subr.mxu0 0.0
  %734 = vmatpush1.xpose.msra.mxu0 0.0
  %735 = vmatprep.subr.mxu0 0.0
  %736 = vmatpush1.xpose.msra.mxu0 %v180
  %737 = vmatprep.subr.mxu0 0.0
  %738 = vmatpush1.xpose.msra.mxu0 %v178
  %739 = vmatprep.subr.mxu0 0.0
  %740 = vmatpush1.xpose.msra.mxu0 %v176
  %741 = vmatprep.subr.mxu0 0.0
  %742 = vmatpush1.xpose.msra.mxu0 %v174
  %743 = vmatprep.subr.mxu0 0.0
  %744 = vmatpush2.xpose.msra.mxu0 0.0
  %745 = vmatprep.subr.mxu0 0.0
  %746 = vmatpush2.xpose.msra.mxu0 0.0
  %747 = vmatprep.subr.mxu0 0.0
  %748 = vmatpush2.xpose.msra.mxu0 0.0
  %749 = vmatprep.subr.mxu0 0.0
  %750 = vmatpush2.xpose.msra.mxu0 0.0
  %751 = vmatprep.subr.mxu0 0.0
  %752 = vmatpush2.xpose.msra.mxu0 0.0
  %753 = vmatprep.subr.mxu0 0.0
  %754 = vmatpush2.xpose.msra.mxu0 0.0
  %755 = vmatprep.subr.mxu0 0.0
  %756 = vmatpush2.xpose.msra.mxu0 0.0
  %757 = vmatprep.subr.mxu0 0.0
  %758 = vmatpush2.xpose.msra.mxu0 0.0
  %759 = vmatprep.subr.mxu0 0.0
  %760 = vmatpush2.xpose.msra.mxu0 0.0
  %761 = vmatprep.subr.mxu0 0.0
  %762 = vmatpush2.xpose.msra.mxu0 0.0
  %763 = vmatprep.subr.mxu0 0.0
  %764 = vmatpush2.xpose.msra.mxu0 0.0
  %765 = vmatprep.subr.mxu0 0.0
  %766 = vmatpush2.xpose.msra.mxu0 0.0
  %767 = vmatprep.subr.mxu0 0.0
  %768 = vmatpush2.xpose.msra.mxu0 0.0
  %769 = vmatprep.subr.mxu0 0.0
  %770 = vmatpush2.xpose.msra.mxu0 0.0
  %771 = vmatprep.subr.mxu0 0.0
  %772 = vmatpush2.xpose.msra.mxu0 0.0
  %773 = vmatprep.subr.mxu0 0.0
  %774 = vmatpush2.xpose.msra.mxu0 0.0
  %775 = vmatprep.mubr.f32.mxu0 0.0
  %776 = vmatmul.mubr.f32.gmra.mxu0 %v700
  %v777 = vpop.f32.mrf.mxu0
  %v778 = vadd.f32 0.0, %v777
  %v779 = vpop.f32.mrf.mxu0
  %780 = vmatprep.mubr.f32.mxu0 0.0
  %781 = vmatmul.mubr.f32.gmra.mxu0 %v703
  %v782 = vpop.f32.mrf.mxu0
  %v783 = vadd.f32 0.0, %v782
  %v784 = vpop.f32.mrf.mxu0
  %785 = vmatprep.mubr.f32.mxu0 0.0
  %786 = vmatmul.mubr.f32.gmra.mxu0 %v706
  %v787 = vpop.f32.mrf.mxu0
  %v788 = vadd.f32 0.0, %v787
  %v789 = vpop.f32.mrf.mxu0
  %790 = vmatprep.mubr.f32.mxu0 0.0
  %791 = vmatmul.mubr.f32.gmra.mxu0 %v709
  %v792 = vpop.f32.mrf.mxu0
  %v793 = vadd.f32 0.0, %v792
  %v794 = vpop.f32.mrf.mxu0
  %795 = vdwg.mxu0
  %v796 = vmul.f32 %v778, 0.5
  %v797 = vmul.f32 %v783, 0.5
  %v798 = vmul.f32 %v788, 0.5
  %v799 = vmul.f32 %v793, 0.5
  %v800 = vadd.f32 %v796, %v18
  %v801 = vadd.f32 %v797, %v19
  %v802 = vadd.f32 %v798, %v20
  %v803 = vadd.f32 %v799, %v21
  %v804 = vsel %vm275, %v800, -inf
  %805 = vmax.xlane.f32.xlu0 %v804
  %v806 = vpop.xlane.xlu0 %805
  %v807 = vsel %vm275, %v801, -inf
  %808 = vmax.xlane.f32.xlu0 %v807
  %v809 = vpop.xlane.xlu0 %808
  %v810 = vsel %vm275, %v802, -inf
  %811 = vmax.xlane.f32.xlu0 %v810
  %v812 = vpop.xlane.xlu0 %811
  %v813 = vsel %vm275, %v803, -inf
  %814 = vmax.xlane.f32.xlu0 %v813
  %v815 = vpop.xlane.xlu0 %814
  %v816 = vsub.f32 %v800, %v806
  %v817 = vsub.f32 %v801, %v809
  %v818 = vsub.f32 %v802, %v812
  %v819 = vsub.f32 %v803, %v815
  %v820 = vmul.f32 %v816, 1.442695
  %v821 = vpow.pop %v820
  %v822 = vmul.f32 %v817, 1.442695
  %v823 = vpow.pop %v822
  %v824 = vmul.f32 %v818, 1.442695
  %v825 = vpow.pop %v824
  %v826 = vmul.f32 %v819, 1.442695
  %v827 = vpow.pop %v826
  %v828 = vsel %vm275, %v821, 0.0
  %829 = vadd.xlane.f32.xlu0 %v828
  %v830 = vpop.xlane.xlu0 %829
  %v831 = vsel %vm275, %v823, 0.0
  %832 = vadd.xlane.f32.xlu0 %v831
  %v833 = vpop.xlane.xlu0 %832
  %v834 = vsel %vm275, %v825, 0.0
  %835 = vadd.xlane.f32.xlu0 %v834
  %v836 = vpop.xlane.xlu0 %835
  %v837 = vsel %vm275, %v827, 0.0
  %838 = vadd.xlane.f32.xlu0 %v837
  %v839 = vpop.xlane.xlu0 %838
  %v840 = vrcp.pop %v830
  %v841 = vrcp.pop %v833
  %v842 = vrcp.pop %v836
  %v843 = vrcp.pop %v839
  %v844 = vmul.f32 %v821, %v840
  %v845 = vmul.f32 %v823, %v841
  %v846 = vmul.f32 %v825, %v842
  %v847 = vmul.f32 %v827, %v843
  %v849 = vsel %vm275, %v844, 0
  %v852 = vsel %vm275, %v845, 0
  %v855 = vsel %vm275, %v846, 0
  %v858 = vsel %vm275, %v847, 0
  %860 = vmatprep.subr.mxu0 0.0
  %861 = vmatpush1.msra.mxu0 0.0
  %862 = vmatprep.subr.mxu0 0.0
  %863 = vmatpush1.msra.mxu0 0.0
  %864 = vmatprep.subr.mxu0 0.0
  %865 = vmatpush1.msra.mxu0 0.0
  %866 = vmatprep.subr.mxu0 0.0
  %867 = vmatpush1.msra.mxu0 0.0
  %868 = vmatprep.subr.mxu0 0.0
  %869 = vmatpush1.msra.mxu0 0.0
  %870 = vmatprep.subr.mxu0 0.0
  %871 = vmatpush1.msra.mxu0 0.0
  %872 = vmatprep.subr.mxu0 0.0
  %873 = vmatpush1.msra.mxu0 0.0
  %874 = vmatprep.subr.mxu0 0.0
  %875 = vmatpush1.msra.mxu0 0.0
  %876 = vmatprep.subr.mxu0 0.0
  %877 = vmatpush1.msra.mxu0 0.0
  %878 = vmatprep.subr.mxu0 0.0
  %879 = vmatpush1.msra.mxu0 0.0
  %880 = vmatprep.subr.mxu0 0.0
  %881 = vmatpush1.msra.mxu0 0.0
  %882 = vmatprep.subr.mxu0 0.0
  %883 = vmatpush1.msra.mxu0 0.0
  %884 = vmatprep.subr.mxu0 0.0
  %885 = vmatpush1.msra.mxu0 %v327
  %886 = vmatprep.subr.mxu0 0.0
  %887 = vmatpush1.msra.mxu0 %v325
  %888 = vmatprep.subr.mxu0 0.0
  %889 = vmatpush1.msra.mxu0 %v323
  %890 = vmatprep.subr.mxu0 0.0
  %891 = vmatpush1.msra.mxu0 %v321
  %892 = vmatprep.subr.mxu0 0.0
  %893 = vmatpush2.msra.mxu0 0.0
  %894 = vmatprep.subr.mxu0 0.0
  %895 = vmatpush2.msra.mxu0 0.0
  %896 = vmatprep.subr.mxu0 0.0
  %897 = vmatpush2.msra.mxu0 0.0
  %898 = vmatprep.subr.mxu0 0.0
  %899 = vmatpush2.msra.mxu0 0.0
  %900 = vmatprep.subr.mxu0 0.0
  %901 = vmatpush2.msra.mxu0 0.0
  %902 = vmatprep.subr.mxu0 0.0
  %903 = vmatpush2.msra.mxu0 0.0
  %904 = vmatprep.subr.mxu0 0.0
  %905 = vmatpush2.msra.mxu0 0.0
  %906 = vmatprep.subr.mxu0 0.0
  %907 = vmatpush2.msra.mxu0 0.0
  %908 = vmatprep.subr.mxu0 0.0
  %909 = vmatpush2.msra.mxu0 0.0
  %910 = vmatprep.subr.mxu0 0.0
  %911 = vmatpush2.msra.mxu0 0.0
  %912 = vmatprep.subr.mxu0 0.0
  %913 = vmatpush2.msra.mxu0 0.0
  %914 = vmatprep.subr.mxu0 0.0
  %915 = vmatpush2.msra.mxu0 0.0
  %916 = vmatprep.subr.mxu0 0.0
  %917 = vmatpush2.msra.mxu0 0.0
  %918 = vmatprep.subr.mxu0 0.0
  %919 = vmatpush2.msra.mxu0 0.0
  %920 = vmatprep.subr.mxu0 0.0
  %921 = vmatpush2.msra.mxu0 0.0
  %922 = vmatprep.subr.mxu0 0.0
  %923 = vmatpush2.msra.mxu0 0.0
  %924 = vmatprep.mubr.f32.mxu0 0.0
  %925 = vmatmul.mubr.f32.gmra.mxu0 %v849
  %v926 = vpop.f32.mrf.mxu0
  %v927 = vadd.f32 0.0, %v926
  %v928 = vpop.f32.mrf.mxu0
  %929 = vmatprep.mubr.f32.mxu0 0.0
  %930 = vmatmul.mubr.f32.gmra.mxu0 %v852
  %v931 = vpop.f32.mrf.mxu0
  %v932 = vadd.f32 0.0, %v931
  %v933 = vpop.f32.mrf.mxu0
  %934 = vmatprep.mubr.f32.mxu0 0.0
  %935 = vmatmul.mubr.f32.gmra.mxu0 %v855
  %v936 = vpop.f32.mrf.mxu0
  %v937 = vadd.f32 0.0, %v936
  %v938 = vpop.f32.mrf.mxu0
  %939 = vmatprep.mubr.f32.mxu0 0.0
  %940 = vmatmul.mubr.f32.gmra.mxu0 %v858
  %v941 = vpop.f32.mrf.mxu0
  %v942 = vadd.f32 0.0, %v941
  %v943 = vpop.f32.mrf.mxu0
  %944 = vdwg.mxu0
  %v945 = vmul.f32 %v927, %v36
  %v946 = vmul.f32 %v932, %v36
  %v947 = vmul.f32 %v937, %v36
  %v948 = vmul.f32 %v942, %v36
  %v949 = vadd.f32 %v691, %v945
  %v950 = vadd.f32 %v692, %v946
  %v951 = vadd.f32 %v693, %v947
  %v952 = vadd.f32 %v694, %v948
  %v953 = vld [vmem:[%s1 + $0x10] sm:$0xff]
  %v954 = vld [vmem:[%s1 + $0x18] sm:$0xf]
  %v955 = vld [vmem:[%s1 + $0x21] sm:$0x1]
  %v956 = vlaneseq
  %v957 = vshrl.u32 %v956, 7
  %v958 = vsub.s32 0, %v957
  %v959 = vrot.slane %v955, %v958
  %v961 = vsel %vm44, %v949, 0
  %v964 = vsel %vm44, %v950, 0
  %v967 = vsel %vm44, %v951, 0
  %v970 = vsel %vm44, %v952, 0
  %v973 = vsel %vm57, %v954, 0
  %975 = vmatprep.subr.mxu0 0.0
  %976 = vmatpush1.msra.mxu0 0.0
  %977 = vmatprep.subr.mxu0 0.0
  %978 = vmatpush1.msra.mxu0 0.0
  %979 = vmatprep.subr.mxu0 0.0
  %980 = vmatpush1.msra.mxu0 0.0
  %981 = vmatprep.subr.mxu0 0.0
  %982 = vmatpush1.msra.mxu0 0.0
  %983 = vmatprep.subr.mxu0 0.0
  %984 = vmatpush1.msra.mxu0 0.0
  %985 = vmatprep.subr.mxu0 0.0
  %986 = vmatpush1.msra.mxu0 0.0
  %987 = vmatprep.subr.mxu0 0.0
  %988 = vmatpush1.msra.mxu0 0.0
  %989 = vmatprep.subr.mxu0 0.0
  %990 = vmatpush1.msra.mxu0 0.0
  %991 = vmatprep.subr.mxu0 0.0
  %992 = vmatpush1.msra.mxu0 0.0
  %993 = vmatprep.subr.mxu0 0.0
  %994 = vmatpush1.msra.mxu0 0.0
  %995 = vmatprep.subr.mxu0 0.0
  %996 = vmatpush1.msra.mxu0 0.0
  %997 = vmatprep.subr.mxu0 0.0
  %998 = vmatpush1.msra.mxu0 0.0
  %999 = vmatprep.subr.mxu0 0.0
  %1000 = vmatpush1.msra.mxu0 0.0
  %1001 = vmatprep.subr.mxu0 0.0
  %1002 = vmatpush1.msra.mxu0 0.0
  %1003 = vmatprep.subr.mxu0 0.0
  %1004 = vmatpush1.msra.mxu0 %v973
  %1005 = vmatprep.subr.mxu0 0.0
  %1006 = vmatpush1.msra.mxu0 %v953
  %1007 = vmatprep.subr.mxu0 0.0
  %1008 = vmatpush2.msra.mxu0 0.0
  %1009 = vmatprep.subr.mxu0 0.0
  %1010 = vmatpush2.msra.mxu0 0.0
  %1011 = vmatprep.subr.mxu0 0.0
  %1012 = vmatpush2.msra.mxu0 0.0
  %1013 = vmatprep.subr.mxu0 0.0
  %1014 = vmatpush2.msra.mxu0 0.0
  %1015 = vmatprep.subr.mxu0 0.0
  %1016 = vmatpush2.msra.mxu0 0.0
  %1017 = vmatprep.subr.mxu0 0.0
  %1018 = vmatpush2.msra.mxu0 0.0
  %1019 = vmatprep.subr.mxu0 0.0
  %1020 = vmatpush2.msra.mxu0 0.0
  %1021 = vmatprep.subr.mxu0 0.0
  %1022 = vmatpush2.msra.mxu0 0.0
  %1023 = vmatprep.subr.mxu0 0.0
  %1024 = vmatpush2.msra.mxu0 0.0
  %1025 = vmatprep.subr.mxu0 0.0
  %1026 = vmatpush2.msra.mxu0 0.0
  %1027 = vmatprep.subr.mxu0 0.0
  %1028 = vmatpush2.msra.mxu0 0.0
  %1029 = vmatprep.subr.mxu0 0.0
  %1030 = vmatpush2.msra.mxu0 0.0
  %1031 = vmatprep.subr.mxu0 0.0
  %1032 = vmatpush2.msra.mxu0 0.0
  %1033 = vmatprep.subr.mxu0 0.0
  %1034 = vmatpush2.msra.mxu0 0.0
  %1035 = vmatprep.subr.mxu0 0.0
  %1036 = vmatpush2.msra.mxu0 0.0
  %1037 = vmatprep.subr.mxu0 0.0
  %1038 = vmatpush2.msra.mxu0 0.0
  %1039 = vmatprep.mubr.f32.mxu0 0.0
  %1040 = vmatmul.mubr.f32.gmra.mxu0 %v961
  %v1041 = vpop.f32.mrf.mxu0
  %v1042 = vadd.f32 %v959, %v1041
  %v1043 = vpop.f32.mrf.mxu0
  %1044 = vmatprep.mubr.f32.mxu0 0.0
  %1045 = vmatmul.mubr.f32.gmra.mxu0 %v964
  %v1046 = vpop.f32.mrf.mxu0
  %v1047 = vadd.f32 %v959, %v1046
  %v1048 = vpop.f32.mrf.mxu0
  %1049 = vmatprep.mubr.f32.mxu0 0.0
  %1050 = vmatmul.mubr.f32.gmra.mxu0 %v967
  %v1051 = vpop.f32.mrf.mxu0
  %v1052 = vadd.f32 %v959, %v1051
  %v1053 = vpop.f32.mrf.mxu0
  %1054 = vmatprep.mubr.f32.mxu0 0.0
  %1055 = vmatmul.mubr.f32.gmra.mxu0 %v970
  %v1056 = vpop.f32.mrf.mxu0
  %v1057 = vadd.f32 %v959, %v1056
  %v1058 = vpop.f32.mrf.mxu0
  %1059 = vdwg.mxu0
  %1060 = vst [vmem:[%s3] sm:$0xff] %v1042
  %1061 = vst [vmem:[%s3 + $0x8] sm:$0xff] %v1047
  %1062 = vst [vmem:[%s3 + $0x10] sm:$0xff] %v1052
  %1063 = vst [vmem:[%s3 + $0x18] sm:$0xff] %v1057
  // Predicated region
  $region14: #{mha_forward.1} parent=0 // pred_check
    _
  $region15: #{mha_forward.1} parent=0 // pred_check_branch
    %1065 = sbr.rel (0) target = $region17
  $region16: #{mha_forward.1} parent=0 // pred_region
    _
  $region17: #{mha_forward.1} parent=0 // pred_fallthru
    _
  // Predicated region
  $region18: #{mha_forward.1} parent=0 // pred_check
    _
  $region19: #{mha_forward.1} parent=0 // pred_check_branch
    %1067 = sbr.rel (0) target = $region21
  $region20: #{mha_forward.1} parent=0 // pred_region
    _
  $region21: #{mha_forward.1} parent=0 // pred_fallthru
    _

</llo_original>
